<compile_context>
chip_gen: v6e
topology: v6e:2x2x1
jax: 0.10.0
libtpu: 0.0.40
codegen_flags: <defaults>
</compile_context>

<pallas_src>
import functools

import jax
import jax.numpy as jnp
from jax.experimental import pallas as pl
from jax.experimental.pallas import tpu as pltpu


def _label_smooth_kernel(x_ref, t_ref, out_ref, m_sc, l_sc, sx_sc, xt_sc, *,
                         smoothing, n_rows, num_classes, tile_b, tile_c):
    i = pl.program_id(0)          # batch tile   ("parallel")
    k = pl.program_id(1)          # class tile   ("arbitrary", innermost)
    nk = pl.num_programs(1)

    @pl.when(k == 0)
    def _init():
        m_sc[...] = jnp.full_like(m_sc, -jnp.inf)
        l_sc[...] = jnp.zeros_like(l_sc)
        sx_sc[...] = jnp.zeros_like(sx_sc)
        xt_sc[...] = jnp.zeros_like(xt_sc)

    x = x_ref[...]                               # (TB, TC), original dtype (no upcast copy)
    t = t_ref[...]                               # (TB, 1), int32

    # Online max along the class axis; max is exact in bf16, upcast only (TB,1).
    m_prev = m_sc[...]
    m_blk = jnp.max(x, axis=-1, keepdims=True).astype(jnp.float32)
    m_new = jnp.maximum(m_prev, m_blk)

    # Single full-width f32 temporary: d = x - m_new; everything derives from it.
    d = x.astype(jnp.float32) - m_new
    sum_exp_d = jnp.sum(jnp.exp(d), axis=-1, keepdims=True)
    sum_d = jnp.sum(d, axis=-1, keepdims=True)

    # Rescale the running sum-exp (flash-softmax style) and accumulate sums.
    l_sc[...] = l_sc[...] * jnp.exp(m_prev - m_new) + sum_exp_d
    # sum_j x_j over this class tile == sum(d) + TC * m_new (cheap rearrangement,
    # avoids a second full-width pass over x).
    sx_sc[...] = sx_sc[...] + sum_d + jnp.float32(tile_c) * m_new
    m_sc[...] = m_new

    # Gather x[target] with an iota==target select on the raw (packed) tile; the
    # per-row sum has at most one non-zero term, so it is exact in bf16.
    col = k * tile_c + jax.lax.broadcasted_iota(jnp.int32, x.shape, 1)
    x_t = jnp.sum(jnp.where(col == t, x, jnp.zeros((), x.dtype)),
                  axis=-1, keepdims=True).astype(jnp.float32)
    xt_sc[...] = xt_sc[...] + x_t

    @pl.when(k == nk - 1)
    def _finalize():
        c = jnp.float32(num_classes)
        lse = m_sc[...] + jnp.log(l_sc[...])                     # (TB, 1)
        w_on = jnp.float32(1.0 - smoothing)
        w_off = jnp.float32(smoothing / (num_classes - 1.0))
        # sum_j w_j * logp_j = w_off * (sum_x - C*lse) + (w_on - w_off) * (x_t - lse)
        sum_logp = sx_sc[...] - c * lse
        logp_t = xt_sc[...] - lse
        row_loss = -(w_off * sum_logp + (w_on - w_off) * logp_t)  # (TB, 1)

        if n_rows % tile_b != 0:
            # Ragged batch: mask garbage rows of the partial last tile.
            # (Only (TB,1)-sized work; NaN/Inf in the unselected branch is fine.)
            row = i * tile_b + jax.lax.broadcasted_iota(jnp.int32, (tile_b, 1), 0)
            row_loss = jnp.where(row < n_rows, row_loss, 0.0)

        out_ref[0, 0] = jnp.sum(row_loss)


def _round_up(a, b):
    return ((a + b - 1) // b) * b


def _vmem_limit_bytes():
    cap = 64 * 1024 * 1024                       # conservative default (v7x per-TC VMEM)
    try:
        cap = int(pltpu.get_tpu_info().vmem_capacity_bytes)
    except Exception:
        pass
    # Leave headroom for compiler-internal scratch; 120 MiB max on 128 MiB chips.
    return max(min(cap - 8 * 1024 * 1024, 120 * 1024 * 1024), 32 * 1024 * 1024)


def _choose_tiles(n, c, itemsize, vmem_limit):
    """Pick (tile_b, tile_c) so the full WORKING SET (not just the input buffer) fits.

    The body materializes ~4 full-tile f32 temporaries on top of the double/triple
    buffered input tile, so one f32 tile is budgeted at ~vmem_limit/8.
    """
    sub = 16 if itemsize < 4 else 8              # sublane packing of the input dtype
    f32_tile_budget = vmem_limit // 8            # bytes for one (tile_b, tile_c) f32 tile

    rows = f32_tile_budget // (c * 4)
    if rows >= sub:
        tile_c = c                               # full class axis fits comfortably
        tile_b = (rows // sub) * sub
    else:
        # Vocab-scale C: stream the class axis with online accumulators.
        tile_c = max((f32_tile_budget // (sub * 4) // 128) * 128, 128)
        while tile_c > 128 and c % tile_c != 0:
            tile_c -= 128
        if c % tile_c != 0:
            # TODO(synk): vocab sizes that are not a multiple of 128 fall back to
            # full-C tiles at the minimum batch tile (may spill for huge C).
            tile_c = c
            tile_b = sub
        else:
            tile_b = max((f32_tile_budget // (tile_c * 4) // sub) * sub, sub)

    # >=2 batch tiles so the "parallel" axis splits across v7x's two TensorCores;
    # 8192-row cap keeps (TB,1) scratch / lane reductions negligible.
    tile_b = min(tile_b, _round_up((n + 1) // 2, sub), 8192)
    tile_b = max(tile_b, sub)
    return tile_b, tile_c


def label_smooth_loss(x, target, smoothing=0.15, tile_b=None, tile_c=None):
    """x: (..., C) float logits, target: (...,) int labels. Returns scalar mean loss."""
    c = x.shape[-1]
    x2 = x.reshape(-1, c)                        # original dtype crosses HBM (no upcast)
    t2 = target.reshape(-1, 1).astype(jnp.int32)
    n = x2.shape[0]

    vmem_limit = _vmem_limit_bytes()
    auto_b, auto_c = _choose_tiles(n, c, x2.dtype.itemsize, vmem_limit)
    tile_b = auto_b if tile_b is None else tile_b
    tile_c = auto_c if tile_c is None else tile_c
    if tile_c != c and c % tile_c != 0:
        raise ValueError("tile_c must divide the number of classes")

    num_b = (n + tile_b - 1) // tile_b           # ragged last tile masked in-kernel (no jnp.pad)
    num_c = c // tile_c

    kernel = functools.partial(
        _label_smooth_kernel, smoothing=float(smoothing), n_rows=n,
        num_classes=c, tile_b=tile_b, tile_c=tile_c)

    # Logits BlockSpec; with small tiles and several grid steps ask for a third
    # pipeline buffer (hides DMA issue latency on v7x's 3.2 TB/s HBM).
    x_tile_bytes = tile_b * tile_c * x2.dtype.itemsize
    x_spec_kwargs = {}
    if hasattr(pl, "Buffered") and num_b * num_c >= 3 and x_tile_bytes <= 8 * 1024 * 1024:
        x_spec_kwargs["pipeline_mode"] = pl.Buffered(3)
    try:
        x_spec = pl.BlockSpec((tile_b, tile_c), lambda i, k: (i, k), **x_spec_kwargs)
    except TypeError:  # pipeline_mode unsupported in this JAX version
        x_spec = pl.BlockSpec((tile_b, tile_c), lambda i, k: (i, k))
    t_spec = pl.BlockSpec((tile_b, 1), lambda i, k: (i, 0))

    cost = pl.CostEstimate(
        flops=int(9 * n * c),
        transcendentals=int(n * c),
        bytes_accessed=int(n * c * x2.dtype.itemsize + n * 4 + num_b * 4),
    )

    partials = pl.pallas_call(
        kernel,
        out_shape=jax.ShapeDtypeStruct((num_b, 1), jnp.float32),
        grid=(num_b, num_c),
        in_specs=[x_spec, t_spec],
        out_specs=pl.BlockSpec((1, 1), lambda i, k: (i, 0), memory_space=pltpu.SMEM),
        scratch_shapes=[pltpu.VMEM((tile_b, 1), jnp.float32)] * 4,
        compiler_params=pltpu.CompilerParams(
            dimension_semantics=("parallel", "arbitrary"),
            vmem_limit_bytes=vmem_limit,
        ),
        cost_estimate=cost,
    )(x2, t2)

    return jnp.sum(partials) / jnp.float32(n)


def _reference(x, target, smoothing=0.15):
    c = x.shape[-1]
    log_prob = jax.nn.log_softmax(x.astype(jnp.float32), axis=-1)
    weight = jnp.full(x.shape, smoothing / (c - 1.0), dtype=jnp.float32)
    onehot = jax.nn.one_hot(target, c, dtype=jnp.float32)
    weight = weight * (1.0 - onehot) + onehot * (1.0 - smoothing)
    return jnp.mean(jnp.sum(-weight * log_prob, axis=-1))


if __name__ == "__main__":
    key = jax.random.PRNGKey(0)
    k1, k2, k3, k4, k5, k6 = jax.random.split(key, 6)

    # 1) Small f32 case (single tile, full class axis).
    N, C = 8, 32
    x = jax.random.normal(k1, (N, C), dtype=jnp.float32)
    t = jax.random.randint(k2, (N,), 0, C, dtype=jnp.int32)
    loss = jax.block_until_ready(label_smooth_loss(x, t, smoothing=0.15))
    ref = _reference(x, t, smoothing=0.15)
    assert jnp.allclose(loss, ref, rtol=1e-5, atol=1e-5), (loss, ref)

    # 2) Ragged bf16 batch: exercises the no-pad / in-kernel row-masking path
    #    and the packed bf16 max / one-hot select.
    N2, C2 = 37, 64
    x2 = jax.random.normal(k3, (N2, C2), dtype=jnp.bfloat16)
    t2 = jax.random.randint(k4, (N2,), 0, C2, dtype=jnp.int32)
    loss2 = jax.block_until_ready(label_smooth_loss(x2, t2, smoothing=0.15))
    ref2 = _reference(x2, t2, smoothing=0.15)
    assert jnp.allclose(loss2, ref2, rtol=1e-4, atol=1e-4), (loss2, ref2)

    # 3) Forced class-axis streaming (vocab-scale code path, kept small here):
    #    4 batch tiles x 4 class tiles, online max / sum-exp accumulators,
    #    triple-buffered logits tiles.
    N3, C3 = 64, 512
    x3 = jax.random.normal(k5, (N3, C3), dtype=jnp.float32)
    t3 = jax.random.randint(k6, (N3,), 0, C3, dtype=jnp.int32)
    loss3 = jax.block_until_ready(
        label_smooth_loss(x3, t3, smoothing=0.15, tile_b=16, tile_c=128))
    ref3 = _reference(x3, t3, smoothing=0.15)
    assert jnp.allclose(loss3, ref3, rtol=1e-4, atol=1e-4), (loss3, ref3)

    print("KERNEL_OK")
</pallas_src>

<mosaic_0001>
module attributes {stable_mosaic.version = 11 : i64} {
  func.func @_label_smooth_kernel(%arg0: i32, %arg1: i32, %arg2: memref<8x32xf32, #tpu.memory_space<vmem>>, %arg3: memref<8x1xi32, #tpu.memory_space<vmem>>, %arg4: memref<1x1xf32, #tpu.memory_space<smem>>, %arg5: memref<8x1xf32, #tpu.memory_space<vmem>>, %arg6: memref<8x1xf32, #tpu.memory_space<vmem>>, %arg7: memref<8x1xf32, #tpu.memory_space<vmem>>, %arg8: memref<8x1xf32, #tpu.memory_space<vmem>>) attributes {dimension_semantics = [#tpu.dimension_semantics<parallel>, #tpu.dimension_semantics<arbitrary>], iteration_bounds = array<i64: 1, 1>, scalar_prefetch = 0 : i64, scratch_operands = 4 : i64, tpu.core_type = #tpu.core_type<tc>, window_params = [{transform_indices = @transform_0, window_bounds = array<i64: 8, 32>}, {transform_indices = @transform_1, window_bounds = array<i64: 8, 1>}, {transform_indices = @transform_2, window_bounds = array<i64: 1, 1>}]} {
    %c0_i32 = arith.constant 0 : i32
    %0 = arith.cmpi eq, %arg1, %c0_i32 : i32
    %1 = arith.extui %0 : i1 to i32
    %c0_i32_0 = arith.constant 0 : i32
    %2 = arith.cmpi ne, %1, %c0_i32_0 : i32
    scf.if %2 {
      %cst_27 = arith.constant 0xFF800000 : f32
      %45 = vector.broadcast %cst_27 : f32 to vector<8x1xf32>
      %c0_28 = arith.constant 0 : index
      %c0_29 = arith.constant 0 : index
      %46 = vector.load %arg5[%c0_28, %c0_29] : memref<8x1xf32, #tpu.memory_space<vmem>>, vector<8x1xf32>
      tpu.vector_store %arg5[%c0_28, %c0_29], %45 {strides = array<i32>} : memref<8x1xf32, #tpu.memory_space<vmem>>, vector<8x1xf32>,
      %cst_30 = arith.constant 0.000000e+00 : f32
      %47 = vector.broadcast %cst_30 : f32 to vector<8x1xf32>
      %c0_31 = arith.constant 0 : index
      %c0_32 = arith.constant 0 : index
      %48 = vector.load %arg6[%c0_31, %c0_32] : memref<8x1xf32, #tpu.memory_space<vmem>>, vector<8x1xf32>
      tpu.vector_store %arg6[%c0_31, %c0_32], %47 {strides = array<i32>} : memref<8x1xf32, #tpu.memory_space<vmem>>, vector<8x1xf32>,
      %cst_33 = arith.constant 0.000000e+00 : f32
      %49 = vector.broadcast %cst_33 : f32 to vector<8x1xf32>
      %c0_34 = arith.constant 0 : index
      %c0_35 = arith.constant 0 : index
      %50 = vector.load %arg7[%c0_34, %c0_35] : memref<8x1xf32, #tpu.memory_space<vmem>>, vector<8x1xf32>
      tpu.vector_store %arg7[%c0_34, %c0_35], %49 {strides = array<i32>} : memref<8x1xf32, #tpu.memory_space<vmem>>, vector<8x1xf32>,
      %cst_36 = arith.constant 0.000000e+00 : f32
      %51 = vector.broadcast %cst_36 : f32 to vector<8x1xf32>
      %c0_37 = arith.constant 0 : index
      %c0_38 = arith.constant 0 : index
      %52 = vector.load %arg8[%c0_37, %c0_38] : memref<8x1xf32, #tpu.memory_space<vmem>>, vector<8x1xf32>
      tpu.vector_store %arg8[%c0_37, %c0_38], %51 {strides = array<i32>} : memref<8x1xf32, #tpu.memory_space<vmem>>, vector<8x1xf32>,
    } else {
    }
    %c0 = arith.constant 0 : index
    %c0_1 = arith.constant 0 : index
    %3 = vector.load %arg2[%c0, %c0_1] : memref<8x32xf32, #tpu.memory_space<vmem>>, vector<8x32xf32>
    %c0_2 = arith.constant 0 : index
    %c0_3 = arith.constant 0 : index
    %4 = vector.load %arg3[%c0_2, %c0_3] : memref<8x1xi32, #tpu.memory_space<vmem>>, vector<8x1xi32>
    %c0_4 = arith.constant 0 : index
    %c0_5 = arith.constant 0 : index
    %5 = vector.load %arg5[%c0_4, %c0_5] : memref<8x1xf32, #tpu.memory_space<vmem>>, vector<8x1xf32>
    %cst = arith.constant dense<0xFF800000> : vector<8xf32>
    %6 = vector.multi_reduction <maximumf>, %3, %cst [1] : vector<8x32xf32> to vector<8xf32>
    %7 = vector.shape_cast %6 : vector<8xf32> to vector<8x1xf32>
    %8 = arith.maximumf %5, %7 : vector<8x1xf32>
    %9 = vector.broadcast %8 : vector<8x1xf32> to vector<8x32xf32>
    %10 = arith.subf %3, %9 : vector<8x32xf32>
    %11 = math.exp %10 : vector<8x32xf32>
    %cst_6 = arith.constant dense<0.000000e+00> : vector<8xf32>
    %12 = vector.multi_reduction <add>, %11, %cst_6 [1] : vector<8x32xf32> to vector<8xf32>
    %13 = vector.shape_cast %12 : vector<8xf32> to vector<8x1xf32>
    %cst_7 = arith.constant dense<0.000000e+00> : vector<8xf32>
    %14 = vector.multi_reduction <add>, %10, %cst_7 [1] : vector<8x32xf32> to vector<8xf32>
    %15 = vector.shape_cast %14 : vector<8xf32> to vector<8x1xf32>
    %c0_8 = arith.constant 0 : index
    %c0_9 = arith.constant 0 : index
    %16 = vector.load %arg6[%c0_8, %c0_9] : memref<8x1xf32, #tpu.memory_space<vmem>>, vector<8x1xf32>
    %17 = arith.subf %5, %8 : vector<8x1xf32>
    %18 = math.exp %17 : vector<8x1xf32>
    %19 = arith.mulf %16, %18 : vector<8x1xf32>
    %20 = arith.addf %19, %13 : vector<8x1xf32>
    %c0_10 = arith.constant 0 : index
    %c0_11 = arith.constant 0 : index
    %21 = vector.load %arg6[%c0_10, %c0_11] : memref<8x1xf32, #tpu.memory_space<vmem>>, vector<8x1xf32>
    tpu.vector_store %arg6[%c0_10, %c0_11], %20 {strides = array<i32>} : memref<8x1xf32, #tpu.memory_space<vmem>>, vector<8x1xf32>,
    %c0_12 = arith.constant 0 : index
    %c0_13 = arith.constant 0 : index
    %22 = vector.load %arg7[%c0_12, %c0_13] : memref<8x1xf32, #tpu.memory_space<vmem>>, vector<8x1xf32>
    %23 = arith.addf %22, %15 : vector<8x1xf32>
    %cst_14 = arith.constant 3.200000e+01 : f32
    %24 = vector.broadcast %cst_14 : f32 to vector<8x1xf32>
    %25 = arith.mulf %24, %8 : vector<8x1xf32>
    %26 = arith.addf %23, %25 : vector<8x1xf32>
    %c0_15 = arith.constant 0 : index
    %c0_16 = arith.constant 0 : index
    %27 = vector.load %arg7[%c0_15, %c0_16] : memref<8x1xf32, #tpu.memory_space<vmem>>, vector<8x1xf32>
    tpu.vector_store %arg7[%c0_15, %c0_16], %26 {strides = array<i32>} : memref<8x1xf32, #tpu.memory_space<vmem>>, vector<8x1xf32>,
    %c0_17 = arith.constant 0 : index
    %c0_18 = arith.constant 0 : index
    %28 = vector.load %arg5[%c0_17, %c0_18] : memref<8x1xf32, #tpu.memory_space<vmem>>, vector<8x1xf32>
    tpu.vector_store %arg5[%c0_17, %c0_18], %8 {strides = array<i32>} : memref<8x1xf32, #tpu.memory_space<vmem>>, vector<8x1xf32>,
    %c32_i32 = arith.constant 32 : i32
    %29 = arith.muli %arg1, %c32_i32 : i32
    %30 = tpu.iota {dimensions = array<i32: 1>} : vector<8x32xi32>
    %31 = vector.broadcast %29 : i32 to vector<8x32xi32>
    %32 = arith.addi %31, %30 : vector<8x32xi32>
    %33 = vector.broadcast %4 : vector<8x1xi32> to vector<8x32xi32>
    %34 = arith.cmpi eq, %32, %33 : vector<8x32xi32>
    %cst_19 = arith.constant 0.000000e+00 : f32
    %35 = vector.broadcast %cst_19 : f32 to vector<8x32xf32>
    %36 = arith.select %34, %3, %35 : vector<8x32xi1>, vector<8x32xf32>
    %cst_20 = arith.constant dense<0.000000e+00> : vector<8xf32>
    %37 = vector.multi_reduction <add>, %36, %cst_20 [1] : vector<8x32xf32> to vector<8xf32>
    %38 = vector.shape_cast %37 : vector<8xf32> to vector<8x1xf32>
    %c0_21 = arith.constant 0 : index
    %c0_22 = arith.constant 0 : index
    %39 = vector.load %arg8[%c0_21, %c0_22] : memref<8x1xf32, #tpu.memory_space<vmem>>, vector<8x1xf32>
    %40 = arith.addf %39, %38 : vector<8x1xf32>
    %c0_23 = arith.constant 0 : index
    %c0_24 = arith.constant 0 : index
    %41 = vector.load %arg8[%c0_23, %c0_24] : memref<8x1xf32, #tpu.memory_space<vmem>>, vector<8x1xf32>
    tpu.vector_store %arg8[%c0_23, %c0_24], %40 {strides = array<i32>} : memref<8x1xf32, #tpu.memory_space<vmem>>, vector<8x1xf32>,
    %c0_i32_25 = arith.constant 0 : i32
    %42 = arith.cmpi eq, %arg1, %c0_i32_25 : i32
    %43 = arith.extui %42 : i1 to i32
    %c0_i32_26 = arith.constant 0 : i32
    %44 = arith.cmpi ne, %43, %c0_i32_26 : i32
    scf.if %44 {
      %c0_27 = arith.constant 0 : index
      %c0_28 = arith.constant 0 : index
      %45 = vector.load %arg5[%c0_27, %c0_28] : memref<8x1xf32, #tpu.memory_space<vmem>>, vector<8x1xf32>
      %c0_29 = arith.constant 0 : index
      %c0_30 = arith.constant 0 : index
      %46 = vector.load %arg6[%c0_29, %c0_30] : memref<8x1xf32, #tpu.memory_space<vmem>>, vector<8x1xf32>
      %47 = math.log %46 : vector<8x1xf32>
      %48 = arith.addf %45, %47 : vector<8x1xf32>
      %c0_31 = arith.constant 0 : index
      %c0_32 = arith.constant 0 : index
      %49 = vector.load %arg7[%c0_31, %c0_32] : memref<8x1xf32, #tpu.memory_space<vmem>>, vector<8x1xf32>
      %cst_33 = arith.constant 3.200000e+01 : f32
      %50 = vector.broadcast %cst_33 : f32 to vector<8x1xf32>
      %51 = arith.mulf %50, %48 : vector<8x1xf32>
      %52 = arith.subf %49, %51 : vector<8x1xf32>
      %c0_34 = arith.constant 0 : index
      %c0_35 = arith.constant 0 : index
      %53 = vector.load %arg8[%c0_34, %c0_35] : memref<8x1xf32, #tpu.memory_space<vmem>>, vector<8x1xf32>
      %54 = arith.subf %53, %48 : vector<8x1xf32>
      %cst_36 = arith.constant 0.00483870972 : f32
      %55 = vector.broadcast %cst_36 : f32 to vector<8x1xf32>
      %56 = arith.mulf %55, %52 : vector<8x1xf32>
      %cst_37 = arith.constant 8.500000e-01 : f32
      %cst_38 = arith.constant 0.00483870972 : f32
      %57 = arith.subf %cst_37, %cst_38 : f32
      %58 = vector.broadcast %57 : f32 to vector<8x1xf32>
      %59 = arith.mulf %58, %54 : vector<8x1xf32>
      %60 = arith.addf %56, %59 : vector<8x1xf32>
      %cst_39 = arith.constant 0.000000e+00 : f32
      %61 = vector.broadcast %cst_39 : f32 to vector<8x1xf32>
      %62 = arith.subf %61, %60 : vector<8x1xf32>
      %63 = vector.shape_cast %62 : vector<8x1xf32> to vector<1x8x1xf32>
      %cst_40 = arith.constant dense<0.000000e+00> : vector<1xf32>
      %64 = vector.multi_reduction <add>, %63, %cst_40 [1, 2] : vector<1x8x1xf32> to vector<1xf32>
      %65 = vector.shape_cast %64 : vector<1xf32> to vector<1x1x1xf32>
      %66 = vector.extract %65[0, 0, 0] : f32 from vector<1x1x1xf32>
      %c0_41 = arith.constant 0 : index
      %c0_42 = arith.constant 0 : index
      %67 = memref.load %arg4[%c0_41, %c0_42] : memref<1x1xf32, #tpu.memory_space<smem>>
      memref.store %66, %arg4[%c0_41, %c0_42] : memref<1x1xf32, #tpu.memory_space<smem>>
    } else {
    }
    return
  }
  func.func @transform_0(%arg0: i32, %arg1: i32) -> (i32, i32) {
    %c0_i32 = arith.constant 0 : i32
    return %arg0, %arg1 : i32, i32
  }
  func.func @transform_1(%arg0: i32, %arg1: i32) -> (i32, i32) {
    %c0_i32 = arith.constant 0 : i32
    %c0_i32_0 = arith.constant 0 : i32
    return %arg0, %c0_i32 : i32, i32
  }
  func.func @transform_2(%arg0: i32, %arg1: i32) -> (i32, i32) {
    %c0_i32 = arith.constant 0 : i32
    %c0_i32_0 = arith.constant 0 : i32
    return %arg0, %c0_i32 : i32, i32
  }
}

</mosaic_0001>

<llo_original>
// kernel: tpu_custom_call.1
$region0: #{tpu_custom_call.1}
  #allocation0 [shape = 'u32[]', space=smem, size = 0x4, offset = 0x4, fixed_abs, tag = 'smem constant byte address 0x4 - core index']
  #allocation1 [shape = 'u32[144,128]{1,0:T(1,128)}', space=vmem, size = 0x12000, scoped, tag = 'internal scratch']
  #allocation2 [shape = 'f32[8,1]{1,0:T(8,128)}', space=vmem, size = 0x1000, scoped, tag = 'scratch operand']
  #allocation3 [shape = 'f32[8,1]{1,0:T(8,128)}', space=vmem, size = 0x1000, scoped, tag = 'scratch operand']
  #allocation4 [shape = 'f32[8,1]{1,0:T(8,128)}', space=vmem, size = 0x1000, scoped, tag = 'scratch operand']
  #allocation5 [shape = 'f32[8,1]{1,0:T(8,128)}', space=vmem, size = 0x1000, scoped, tag = 'scratch operand']
  %s0 = inlined_call_operand.vmem [shape: f32[8,32], index: 0, kind: input, shape index: {}]
  %s1 = inlined_call_operand.vmem [shape: s32[8,1], index: 1, kind: input, shape index: {}]
  %s2 = inlined_call_operand.hbm [shape: f32[1,1], index: 2, kind: output, shape index: {}]
  %s3 = sld [smem:[#allocation0]]
  $region26: #{tpu_custom_call.1} parent=0
    _
  %s5 = ssub.s32 1, %s3
  %s6 = scalar_select 0, %s5, %s3
  $region1: #{tpu_custom_call.1} parent=0
    #allocation6 [shape = 'u8[512]{0}', space=smem, size = 0x200, scoped, tag = 'output window, operand 0, single buffered']
    #allocation7 [shape = 's32[1]{0}', space=sflag, size = 0x4, scoped, tag = 'scoped memory for tpu_custom_call.1']
    %7 = vsyncpa [#allocation7], 0
    // Predicated region
    $region2: #{tpu_custom_call.1} parent=1 // pred_check
      _
    $region3: #{tpu_custom_call.1} parent=1 // pred_check_branch
      %9 = sbr.rel (0) target = $region5
    $region4: #{tpu_custom_call.1} parent=1 // pred_region
      _
    $region5: #{tpu_custom_call.1} parent=1 // pred_fallthru
      _
    // Predicated region
    $region6: #{tpu_custom_call.1} parent=1 // pred_check
      _
    $region7: #{tpu_custom_call.1} parent=1 // pred_check_branch
      %11 = sbr.rel (0) target = $region9
    $region8: #{tpu_custom_call.1} parent=1 // pred_region
      _
    $region9: #{tpu_custom_call.1} parent=1 // pred_fallthru
      _
    %p12 = scmp.eq.s32.totalorder 0, 0
    // Predicated region
    $region10: #{tpu_custom_call.1} parent=1 // pred_check
      %p13 = pneg %p12
    $region11: #{tpu_custom_call.1} parent=1 // pred_check_branch
      %15 = sbr.rel (%p13) target = $region13
    $region12: #{tpu_custom_call.1} parent=1 // pred_region
      %vm16 = vcmask 7168
      %17 = vst.msk [vmem:[#allocation2] sm:$0xff] %vm16, -inf
      %18 = vst.msk [vmem:[#allocation3] sm:$0xff] %vm16, 0.0
      %19 = vst.msk [vmem:[#allocation4] sm:$0xff] %vm16, 0.0
      %20 = vst.msk [vmem:[#allocation5] sm:$0xff] %vm16, 0.0
    $region13: #{tpu_custom_call.1} parent=1 // pred_fallthru
      _
    %v21 = vld [vmem:[%s0] sm:$0xff]
    %v22 = vld [vmem:[%s1] sm:$0xff]
    %v23 = vld [vmem:[#allocation2] sm:$0xff]
    %vm24 = vcmask 261120
    %v25 = vsel %vm24, %v21, -inf
    %26 = vmax.xlane.f32.xlu0 %v25
    %v27 = vpop.xlane.xlu0 %26
    %v28 = vmax.f32 %v23, %v27
    %30 = vset.pattern.permute.xlu0 0
    %31 = vperm.xlu0 %30, %v28
    %v32 = vpop.permute.xlu0 %31
    %v34 = vsub.f32 %v21, %v32
    %v35 = vmul.f32 %v34, 1.442695
    %v36 = vpow.pop %v35
    %v37 = vsel %vm24, %v36, 0.0
    %38 = vadd.xlane.f32.xlu0 %v37
    %v39 = vpop.xlane.xlu0 %38
    %v40 = vsel %vm24, %v34, 0.0
    %41 = vadd.xlane.f32.xlu0 %v40
    %v42 = vpop.xlane.xlu0 %41
    %v43 = vld [vmem:[#allocation3] sm:$0xff]
    %v44 = vsub.f32 %v23, %v28
    %v45 = vmul.f32 %v44, 1.442695
    %v46 = vpow.pop %v45
    %v47 = vmul.f32 %v43, %v46
    %v48 = vadd.f32 %v47, %v39
    %vm49 = vcmask 7168
    %50 = vst.msk [vmem:[#allocation3] sm:$0xff] %vm49, %v48
    %v51 = vld [vmem:[#allocation4] sm:$0xff]
    %v52 = vadd.f32 %v51, %v42
    %v53 = vmul.f32 %v28, 32.0
    %v54 = vadd.f32 %v52, %v53
    %55 = vst.msk [vmem:[#allocation4] sm:$0xff] %vm49, %v54
    %56 = vst.msk [vmem:[#allocation2] sm:$0xff] %vm49, %v28
    %s57 = smul.u32 0, 32
    %v58 = vlaneseq
    %v59 = vand.u32 %v58, 127
    %v60 = vstv %s57
    %v61 = vadd.s32 %v60, %v59
    %62 = vset.pattern.permute.xlu0 0
    %63 = vperm.xlu0 %62, %v22
    %v64 = vpop.permute.xlu0 %63
    %vm65 = vcmp.eq.s32.totalorder %v61, %v64
    %v66 = vsel %vm65, %v21, 0.0
    %v67 = vsel %vm24, %v66, 0.0
    %68 = vadd.xlane.f32.xlu0 %v67
    %v69 = vpop.xlane.xlu0 %68
    %v70 = vld [vmem:[#allocation5] sm:$0xff]
    %v71 = vadd.f32 %v70, %v69
    %72 = vst.msk [vmem:[#allocation5] sm:$0xff] %vm49, %v71
    // Predicated region
    $region14: #{tpu_custom_call.1} parent=1 // pred_check
      %p73 = pneg %p12
    $region15: #{tpu_custom_call.1} parent=1 // pred_check_branch
      %75 = sbr.rel (%p73) target = $region17
    $region16: #{tpu_custom_call.1} parent=1 // pred_region
      %v76 = vld [vmem:[#allocation2] sm:$0xff]
      %v77 = vld [vmem:[#allocation3] sm:$0xff]
      %v78 = vlog2.pop %v77
      %v79 = vmul.f32 %v78, 0.6931472
      %v80 = vadd.f32 %v76, %v79
      %v81 = vld [vmem:[#allocation4] sm:$0xff]
      %v82 = vmul.f32 %v80, 32.0
      %v83 = vsub.f32 %v81, %v82
      %v84 = vld [vmem:[#allocation5] sm:$0xff]
      %v85 = vsub.f32 %v84, %v80
      %v86 = vmul.f32 %v83, 0.0048387097
      %v87 = vmul.f32 %v85, 0.8451613
      %v88 = vadd.f32 %v86, %v87
      %v89 = vsub.f32 0.0, %v88
      %v90 = vsel %vm49, %v89, 0.0
      %91 = vadd.xlane.f32.xlu0 %v90
      %v92 = vpop.xlane.xlu0 %91
      %v93 = vrot.slane %v92, 4
      %v94 = vadd.f32 %v92, %v93
      %v95 = vrot.slane %v94, 2
      %v96 = vadd.f32 %v94, %v95
      %v97 = vrot.slane %v96, 1
      %v98 = vadd.f32 %v96, %v97
      %s99 = vtos %v98
      %s100 = scalar_lea.smem [#allocation6], 0
      %101 = sst [smem:[%s100]] %s99
    $region17: #{tpu_custom_call.1} parent=1 // pred_fallthru
      _
    // Predicated region
    $region18: #{tpu_custom_call.1} parent=1 // pred_check
      _
    $region19: #{tpu_custom_call.1} parent=1 // pred_check_branch
      %103 = sbr.rel (0) target = $region21
    $region20: #{tpu_custom_call.1} parent=1 // pred_region
      %s105 = ssub.s32 16, 16
      %106 = vsyncadd [#allocation7], %s105
      %109 = dma.smem_to_hbm [#allocation6], 16, %s2, [#allocation7]
    $region21: #{tpu_custom_call.1} parent=1 // pred_fallthru
      _
    // Predicated region
    $region22: #{tpu_custom_call.1} parent=1 // pred_check
      _
    $region23: #{tpu_custom_call.1} parent=1 // pred_check_branch
      %111 = sbr.rel (0) target = $region25
    $region24: #{tpu_custom_call.1} parent=1 // pred_region
      %112 = dma.done [#allocation7], 16
    $region25: #{tpu_custom_call.1} parent=1 // pred_fallthru
      _
    %113 = sfence
    %114 = vsyncpa [#allocation7], 1

</llo_original>
